<compile_context>
chip_gen: v6e
topology: v6e:2x2x1
jax: 0.10.0
libtpu: 0.0.40
codegen_flags: <defaults>
</compile_context>

<pallas_src>
import functools

import numpy as np
import jax
import jax.numpy as jnp
from jax import lax
from jax.experimental import pallas as pl
from jax.experimental.pallas import tpu as pltpu

_LANE = 128
_SUBLANE = 8
_MAX_BLOCK_ROWS = 1024   # (1024, 128) f32 = 512 KiB/buffer; in+out double-buffered ~2 MiB.


def _ceil_div(a, b):
    return -(-a // b)


def _round_up(a, b):
    return _ceil_div(a, b) * b


def _annealed_temperature(t, r, ub, lb=1e-8, t0=0):
    # scheme == 'exp0':  tau = ub * exp(-r * (t - t0)), clamped to [lb, ub]
    tau = ub * np.exp(-r * (t - t0))
    return float(np.minimum(np.maximum(tau, lb), ub))


def _hash_to_uniform(idx_u32, seed_u32):
    """Counter-based hash (murmur3-style finalizer) -> uniform f32 in (0, 1)."""
    v = idx_u32 + seed_u32 * jnp.uint32(0x9E3779B9)
    v = v ^ (v >> jnp.uint32(16))
    v = v * jnp.uint32(0x7FEB352D)
    v = v ^ (v >> jnp.uint32(15))
    v = v * jnp.uint32(0x846CA68B)
    v = v ^ (v >> jnp.uint32(16))
    # Top 23 bits -> (0, 1), strictly open and exactly representable, so the
    # logs below never see 0 or 1.
    u23 = (v >> jnp.uint32(9)).astype(jnp.int32).astype(jnp.float32)
    return (u23 + jnp.float32(0.5)) * jnp.float32(1.0 / (1 << 23))


def _sga_train_kernel(seed_ref, x_ref, o_ref, *, temperature):
    x = x_ref[...].astype(jnp.float32)
    br, lanes = x.shape
    inv_t = jnp.float32(1.0 / temperature)
    one_m_eps = jnp.float32(1.0 - 1e-5)

    x_floor = jnp.floor(x)
    x_ceil = jnp.ceil(x)

    # d1 = x - floor(x), d2 = ceil(x) - x are both in [0, 1): only the upper
    # clamp of torch.clamp(., -1+eps, 1-eps) can ever bind.
    d1 = jnp.minimum(x - x_floor, one_m_eps)
    d2 = jnp.minimum(x_ceil - x, one_m_eps)

    # atanh(d1) - atanh(d2) = 0.5 * (log((1+d1)(1-d2)) - log((1-d1)(1+d2)))
    log_num = jnp.log((1.0 + d1) * (1.0 - d2))
    log_den = jnp.log((1.0 - d1) * (1.0 + d2))
    logit_diff = jnp.float32(0.5) * (log_num - log_den) * inv_t   # = l_ceil - l_floor

    # Gumbel difference g_ceil - g_floor ~ Logistic(0, 1) from one uniform draw.
    row = lax.broadcasted_iota(jnp.int32, (br, lanes), 0)
    col = lax.broadcasted_iota(jnp.int32, (br, lanes), 1)
    idx = pl.program_id(0) * (br * lanes) + row * lanes + col
    u = _hash_to_uniform(idx.astype(jnp.uint32), seed_ref[0].astype(jnp.uint32))
    logistic = jnp.log(u) - jnp.log(1.0 - u)

    # 2-class RelaxedOneHotCategorical sample collapses to a sigmoid:
    #   y_ceil = sigmoid((l_ceil - l_floor + (g_ceil - g_floor)) / T)
    z = (logit_diff + logistic) * inv_t
    e = jnp.exp(-jnp.abs(z))                 # stable sigmoid, e in (0, 1]
    r = 1.0 / (1.0 + e)
    y_ceil = jnp.where(z >= 0, r, e * r)

    # x_tilde = floor * (1 - y_ceil) + ceil * y_ceil
    o_ref[...] = (x_floor + (x_ceil - x_floor) * y_ceil).astype(o_ref.dtype)


def _round_kernel(x_ref, o_ref):
    # torch.round == round-half-to-even == jnp.round
    o_ref[...] = jnp.round(x_ref[...])


def _prepare_slab(x):
    """Flatten into a lane-dense (rows, 128) slab, avoiding copies when possible."""
    n = int(x.size)
    flat = x.reshape(-1)
    if n % _LANE:
        flat = jnp.pad(flat, (0, _round_up(n, _LANE) - n))   # only copy path
    slab = flat.reshape(-1, _LANE)
    rows = slab.shape[0]
    br = min(_MAX_BLOCK_ROWS, _round_up(rows, _SUBLANE))
    grid = _ceil_div(rows, br)          # partial boundary block handled by Pallas
    return slab, br, grid, n


def quantizator_sga(x, it=None, mode=None, total_it=None, seed=0):
    """JAX/Pallas equivalent of Quantizator_SGA.forward."""
    orig_shape = x.shape
    orig_dtype = x.dtype

    slab, br, grid, n = _prepare_slab(x)
    rows = slab.shape[0]

    if mode == 'training':
        assert it is not None and total_it is not None
        t0 = int(total_it * 0.35)
        temperature = _annealed_temperature(it, r=0.001, ub=0.5, t0=t0)
        kernel = functools.partial(_sga_train_kernel, temperature=temperature)
        seed_arr = jnp.array([seed], dtype=jnp.int32)

        out2d = pl.pallas_call(
            kernel,
            out_shape=jax.ShapeDtypeStruct((rows, _LANE), orig_dtype),
            grid_spec=pltpu.PrefetchScalarGridSpec(
                num_scalar_prefetch=1,
                grid=(grid,),
                in_specs=[pl.BlockSpec((br, _LANE), lambda i, seed: (i, 0))],
                out_specs=pl.BlockSpec((br, _LANE), lambda i, seed: (i, 0)),
            ),
            compiler_params=pltpu.CompilerParams(
                dimension_semantics=("parallel",)),
        )(seed_arr, slab)
    else:
        out2d = pl.pallas_call(
            _round_kernel,
            out_shape=jax.ShapeDtypeStruct((rows, _LANE), orig_dtype),
            grid=(grid,),
            in_specs=[pl.BlockSpec((br, _LANE), lambda i: (i, 0))],
            out_specs=pl.BlockSpec((br, _LANE), lambda i: (i, 0)),
            compiler_params=pltpu.CompilerParams(
                dimension_semantics=("parallel",)),
        )(slab)

    flat_out = out2d.reshape(-1)
    if flat_out.shape[0] != n:
        flat_out = flat_out[:n]
    return flat_out.reshape(orig_shape)


if __name__ == "__main__":
    key = jax.random.PRNGKey(0)
    # NCHW input, small shapes: batch=2, channels=4, spatial=16x16
    x = jax.random.normal(key, (2, 4, 16, 16), dtype=jnp.float32) * 3.0

    # training mode (stochastic Gumbel annealing path)
    y_train = quantizator_sga(x, it=100, mode='training', total_it=1000, seed=0)
    jax.block_until_ready(y_train)
    assert y_train.shape == x.shape and y_train.dtype == x.dtype

    # eval mode (plain rounding path)
    y_eval = quantizator_sga(x)
    jax.block_until_ready(y_eval)
    assert y_eval.shape == x.shape

    # sanity: x_tilde is a convex combination of floor(x) and ceil(x)
    lo = jnp.floor(x) - 1e-4
    hi = jnp.ceil(x) + 1e-4
    assert bool(jnp.all((y_train >= lo) & (y_train <= hi)))
    assert bool(jnp.all(y_eval == jnp.round(x)))

    print("KERNEL_OK")
</pallas_src>

<mosaic_0001>
module attributes {stable_mosaic.version = 11 : i64} {
  func.func @_sga_train_kernel(%arg0: i32, %arg1: memref<1xi32, #tpu.memory_space<smem>>, %arg2: memref<16x128xf32, #tpu.memory_space<vmem>>, %arg3: memref<16x128xf32, #tpu.memory_space<vmem>>) attributes {dimension_semantics = [#tpu.dimension_semantics<parallel>], iteration_bounds = array<i64: 1>, scalar_prefetch = 1 : i64, scratch_operands = 0 : i64, tpu.core_type = #tpu.core_type<tc>, window_params = [{transform_indices = @transform_0, window_bounds = array<i64: 16, 128>}, {transform_indices = @transform_1, window_bounds = array<i64: 16, 128>}]} {
    %c0 = arith.constant 0 : index
    %c0_0 = arith.constant 0 : index
    %0 = vector.load %arg2[%c0, %c0_0] : memref<16x128xf32, #tpu.memory_space<vmem>>, vector<16x128xf32>
    %1 = math.floor %0 : vector<16x128xf32>
    %2 = math.ceil %0 : vector<16x128xf32>
    %3 = arith.subf %0, %1 : vector<16x128xf32>
    %cst = arith.constant 0.999989986 : f32
    %4 = vector.broadcast %cst : f32 to vector<16x128xf32>
    %5 = arith.minimumf %3, %4 : vector<16x128xf32>
    %6 = arith.subf %2, %0 : vector<16x128xf32>
    %cst_1 = arith.constant 0.999989986 : f32
    %7 = vector.broadcast %cst_1 : f32 to vector<16x128xf32>
    %8 = arith.minimumf %6, %7 : vector<16x128xf32>
    %cst_2 = arith.constant 1.000000e+00 : f32
    %9 = vector.broadcast %cst_2 : f32 to vector<16x128xf32>
    %10 = arith.addf %9, %5 : vector<16x128xf32>
    %cst_3 = arith.constant 1.000000e+00 : f32
    %11 = vector.broadcast %cst_3 : f32 to vector<16x128xf32>
    %12 = arith.subf %11, %8 : vector<16x128xf32>
    %13 = arith.mulf %10, %12 : vector<16x128xf32>
    %14 = math.log %13 : vector<16x128xf32>
    %cst_4 = arith.constant 1.000000e+00 : f32
    %15 = vector.broadcast %cst_4 : f32 to vector<16x128xf32>
    %16 = arith.subf %15, %5 : vector<16x128xf32>
    %cst_5 = arith.constant 1.000000e+00 : f32
    %17 = vector.broadcast %cst_5 : f32 to vector<16x128xf32>
    %18 = arith.addf %17, %8 : vector<16x128xf32>
    %19 = arith.mulf %16, %18 : vector<16x128xf32>
    %20 = math.log %19 : vector<16x128xf32>
    %21 = arith.subf %14, %20 : vector<16x128xf32>
    %cst_6 = arith.constant 5.000000e-01 : f32
    %22 = vector.broadcast %cst_6 : f32 to vector<16x128xf32>
    %23 = arith.mulf %22, %21 : vector<16x128xf32>
    %cst_7 = arith.constant 2.000000e+00 : f32
    %24 = vector.broadcast %cst_7 : f32 to vector<16x128xf32>
    %25 = arith.mulf %23, %24 : vector<16x128xf32>
    %26 = tpu.iota {dimensions = array<i32: 0>} : vector<16x128xi32>
    %27 = tpu.iota {dimensions = array<i32: 1>} : vector<16x128xi32>
    %c2048_i32 = arith.constant 2048 : i32
    %28 = arith.muli %arg0, %c2048_i32 : i32
    %c128_i32 = arith.constant 128 : i32
    %29 = vector.broadcast %c128_i32 : i32 to vector<16x128xi32>
    %30 = arith.muli %26, %29 : vector<16x128xi32>
    %31 = vector.broadcast %28 : i32 to vector<16x128xi32>
    %32 = arith.addi %31, %30 : vector<16x128xi32>
    %33 = arith.addi %32, %27 : vector<16x128xi32>
    %c0_8 = arith.constant 0 : index
    %34 = memref.load %arg1[%c0_8] : memref<1xi32, #tpu.memory_space<smem>>
    %c-1640531527_i32 = arith.constant -1640531527 : i32
    %35 = arith.muli %34, %c-1640531527_i32 : i32
    %36 = vector.broadcast %35 : i32 to vector<16x128xi32>
    %37 = arith.addi %33, %36 : vector<16x128xi32>
    %c16_i32 = arith.constant 16 : i32
    %38 = vector.broadcast %c16_i32 : i32 to vector<16x128xi32>
    %39 = arith.shrui %37, %38 : vector<16x128xi32>
    %40 = arith.xori %37, %39 : vector<16x128xi32>
    %c2146121005_i32 = arith.constant 2146121005 : i32
    %41 = vector.broadcast %c2146121005_i32 : i32 to vector<16x128xi32>
    %42 = arith.muli %40, %41 : vector<16x128xi32>
    %c15_i32 = arith.constant 15 : i32
    %43 = vector.broadcast %c15_i32 : i32 to vector<16x128xi32>
    %44 = arith.shrui %42, %43 : vector<16x128xi32>
    %45 = arith.xori %42, %44 : vector<16x128xi32>
    %c-2073254261_i32 = arith.constant -2073254261 : i32
    %46 = vector.broadcast %c-2073254261_i32 : i32 to vector<16x128xi32>
    %47 = arith.muli %45, %46 : vector<16x128xi32>
    %c16_i32_9 = arith.constant 16 : i32
    %48 = vector.broadcast %c16_i32_9 : i32 to vector<16x128xi32>
    %49 = arith.shrui %47, %48 : vector<16x128xi32>
    %50 = arith.xori %47, %49 : vector<16x128xi32>
    %c9_i32 = arith.constant 9 : i32
    %51 = vector.broadcast %c9_i32 : i32 to vector<16x128xi32>
    %52 = arith.shrui %50, %51 : vector<16x128xi32>
    %53 = arith.sitofp %52 : vector<16x128xi32> to vector<16x128xf32>
    %cst_10 = arith.constant 5.000000e-01 : f32
    %54 = vector.broadcast %cst_10 : f32 to vector<16x128xf32>
    %55 = arith.addf %53, %54 : vector<16x128xf32>
    %cst_11 = arith.constant 1.1920929E-7 : f32
    %56 = vector.broadcast %cst_11 : f32 to vector<16x128xf32>
    %57 = arith.mulf %55, %56 : vector<16x128xf32>
    %58 = math.log %57 : vector<16x128xf32>
    %cst_12 = arith.constant 1.000000e+00 : f32
    %59 = vector.broadcast %cst_12 : f32 to vector<16x128xf32>
    %60 = arith.subf %59, %57 : vector<16x128xf32>
    %61 = math.log %60 : vector<16x128xf32>
    %62 = arith.subf %58, %61 : vector<16x128xf32>
    %63 = arith.addf %25, %62 : vector<16x128xf32>
    %cst_13 = arith.constant 2.000000e+00 : f32
    %64 = vector.broadcast %cst_13 : f32 to vector<16x128xf32>
    %65 = arith.mulf %63, %64 : vector<16x128xf32>
    %66 = math.absf %65 : vector<16x128xf32>
    %cst_14 = arith.constant 0.000000e+00 : f32
    %67 = vector.broadcast %cst_14 : f32 to vector<16x128xf32>
    %68 = arith.subf %67, %66 : vector<16x128xf32>
    %69 = math.exp %68 : vector<16x128xf32>
    %cst_15 = arith.constant 1.000000e+00 : f32
    %70 = vector.broadcast %cst_15 : f32 to vector<16x128xf32>
    %71 = arith.addf %70, %69 : vector<16x128xf32>
    %cst_16 = arith.constant 1.000000e+00 : f32
    %72 = vector.broadcast %cst_16 : f32 to vector<16x128xf32>
    %73 = arith.divf %72, %71 : vector<16x128xf32>
    %cst_17 = arith.constant 0.000000e+00 : f32
    %74 = vector.broadcast %cst_17 : f32 to vector<16x128xf32>
    %75 = arith.cmpf oge, %65, %74 : vector<16x128xf32>
    %76 = arith.mulf %69, %73 : vector<16x128xf32>
    %77 = arith.select %75, %73, %76 : vector<16x128xi1>, vector<16x128xf32>
    %78 = arith.subf %2, %1 : vector<16x128xf32>
    %79 = arith.mulf %78, %77 : vector<16x128xf32>
    %80 = arith.addf %1, %79 : vector<16x128xf32>
    %c0_18 = arith.constant 0 : index
    %c0_19 = arith.constant 0 : index
    %81 = vector.load %arg3[%c0_18, %c0_19] : memref<16x128xf32, #tpu.memory_space<vmem>>, vector<16x128xf32>
    tpu.vector_store %arg3[%c0_18, %c0_19], %80 {strides = array<i32>} : memref<16x128xf32, #tpu.memory_space<vmem>>, vector<16x128xf32>,
    return
  }
  func.func @transform_0(%arg0: i32, %arg1: memref<1xi32, #tpu.memory_space<smem>>) -> (i32, i32) {
    %c0_i32 = arith.constant 0 : i32
    %c0_i32_0 = arith.constant 0 : i32
    return %arg0, %c0_i32 : i32, i32
  }
  func.func @transform_1(%arg0: i32, %arg1: memref<1xi32, #tpu.memory_space<smem>>) -> (i32, i32) {
    %c0_i32 = arith.constant 0 : i32
    %c0_i32_0 = arith.constant 0 : i32
    return %arg0, %c0_i32 : i32, i32
  }
}

</mosaic_0001>

<llo_original>
// kernel: tpu_custom_call.1
$region0: #{tpu_custom_call.1}
  #allocation0 [shape = 'u32[]', space=smem, size = 0x4, offset = 0x4, fixed_abs, tag = 'smem constant byte address 0x4 - core index']
  #allocation1 [shape = 'u32[144,128]{1,0:T(1,128)}', space=vmem, size = 0x12000, scoped, tag = 'internal scratch']
  #allocation2 [shape = 's32[1]{0}', space=sflag, size = 0x4, scoped, tag = 'scoped memory for tpu_custom_call.1']
  #allocation3 [shape = 's32[1]{0:T(128)S(6)}', space=smem, size = 0x200, scoped, tag = 'prefetched SMEM operand 0']
  %s0 = inlined_call_operand.<no memory space> [shape: s32[1], index: 0, kind: input, shape index: {}]
  %s1 = inlined_call_operand.hbm [shape: f32[16,128], index: 1, kind: input, shape index: {}]
  %s2 = inlined_call_operand.hbm [shape: f32[16,128], index: 2, kind: output, shape index: {}]
  %s3 = sld [smem:[#allocation0]]
  $region18: #{tpu_custom_call.1} parent=0
    _
  %s5 = ssub.s32 1, %s3
  %s6 = scalar_select 0, %s5, %s3
  %7 = sst [smem:[#allocation3]] %s0
  $region1: #{tpu_custom_call.1} parent=0
    #allocation4 [shape = 'u8[8192]{0}', space=vmem, size = 0x2000, scoped, tag = 'input window, operand 1, single buffered']
    #allocation5 [shape = 's32[1]{0}', space=sflag, size = 0x4, scoped, tag = 'scoped memory for tpu_custom_call.1']
    #allocation6 [shape = 's32[1]{0}', space=sflag, size = 0x4, scoped, tag = 'scoped memory for tpu_custom_call.1']
    #allocation7 [shape = 'u8[8192]{0}', space=vmem, size = 0x2000, scoped, tag = 'output window, operand 0, single buffered']
    %8 = vsyncpa [#allocation5], 0
    %9 = vsyncpa [#allocation6], 0
    // Predicated region
    $region2: #{tpu_custom_call.1} parent=1 // pred_check
      _
    $region3: #{tpu_custom_call.1} parent=1 // pred_check_branch
      %11 = sbr.rel (0) target = $region5
    $region4: #{tpu_custom_call.1} parent=1 // pred_region
      %s13 = ssub.s32 256, 256
      %14 = vsyncadd [#allocation5], %s13
      %s15 = sshll.u32 [#allocation4], 4
      %s16 = int_to_ptr.vmem [resolvable:$true] %s15
      %21 = dma.hbm_to_vmem [thread:$0]  %s1, 256, %s16, [#allocation5], 128, 128, 8
    $region5: #{tpu_custom_call.1} parent=1 // pred_fallthru
      _
    // Predicated region
    $region6: #{tpu_custom_call.1} parent=1 // pred_check
      _
    $region7: #{tpu_custom_call.1} parent=1 // pred_check_branch
      %23 = sbr.rel (0) target = $region9
    $region8: #{tpu_custom_call.1} parent=1 // pred_region
      %24 = dma.done [#allocation5], 256
    $region9: #{tpu_custom_call.1} parent=1 // pred_fallthru
      _
    %v25 = vld [vmem:[#allocation4] sm:$0xff]
    %v26 = vld [vmem:[#allocation4 + $0x8] sm:$0xff]
    %v27 = vfloor.f32 %v25
    %v28 = vfloor.f32 %v26
    %v29 = vceil.f32 %v25
    %v30 = vceil.f32 %v26
    %v31 = vsub.f32 %v25, %v27
    %v32 = vsub.f32 %v26, %v28
    %v33 = vmin.f32 %v31, 0.99999
    %v34 = vmin.f32 %v32, 0.99999
    %v35 = vsub.f32 %v29, %v25
    %v36 = vsub.f32 %v30, %v26
    %v37 = vmin.f32 %v35, 0.99999
    %v38 = vmin.f32 %v36, 0.99999
    %v39 = vadd.f32 %v33, 1.0
    %v40 = vadd.f32 %v34, 1.0
    %v41 = vsub.f32 1.0, %v37
    %v42 = vsub.f32 1.0, %v38
    %v43 = vmul.f32 %v39, %v41
    %v44 = vmul.f32 %v40, %v42
    %v45 = vlog2.pop %v43
    %v46 = vmul.f32 %v45, 0.6931472
    %v47 = vlog2.pop %v44
    %v48 = vmul.f32 %v47, 0.6931472
    %v49 = vsub.f32 1.0, %v33
    %v50 = vsub.f32 1.0, %v34
    %v51 = vadd.f32 %v37, 1.0
    %v52 = vadd.f32 %v38, 1.0
    %v53 = vmul.f32 %v49, %v51
    %v54 = vmul.f32 %v50, %v52
    %v55 = vlog2.pop %v53
    %v56 = vmul.f32 %v55, 0.6931472
    %v57 = vlog2.pop %v54
    %v58 = vmul.f32 %v57, 0.6931472
    %v59 = vsub.f32 %v46, %v56
    %v60 = vsub.f32 %v48, %v58
    %v61 = vmul.f32 %v59, 0.5
    %v62 = vmul.f32 %v60, 0.5
    %v63 = vmul.f32 %v61, 2.0
    %v64 = vmul.f32 %v62, 2.0
    %v65 = vlaneseq
    %v66 = vshrl.u32 %v65, 7
    %v67 = vadd.s32 %v66, 8
    %v68 = vlaneseq
    %v69 = vand.u32 %v68, 127
    %s70 = smul.u32 0, 2048
    %v71 = vmul.u32 %v66, 128
    %v72 = vmul.u32 %v67, 128
    %v73 = vstv %s70
    %v74 = vadd.s32 %v73, %v71
    %v75 = vadd.s32 %v73, %v72
    %v76 = vadd.s32 %v74, %v69
    %v77 = vadd.s32 %v75, %v69
    %s78 = sld [smem:[#allocation3]]
    %s79 = smul.u32 %s78, 2654435769
    %v80 = vstv %s79
    %v81 = vadd.s32 %v76, %v80
    %v82 = vadd.s32 %v77, %v80
    %v83 = vshrl.u32 %v81, 16
    %v84 = vshrl.u32 %v82, 16
    %v85 = vxor.u32 %v81, %v83
    %v86 = vxor.u32 %v82, %v84
    %v87 = vmul.u32 %v85, 2146121005
    %v88 = vmul.u32 %v86, 2146121005
    %v89 = vshrl.u32 %v87, 15
    %v90 = vshrl.u32 %v88, 15
    %v91 = vxor.u32 %v87, %v89
    %v92 = vxor.u32 %v88, %v90
    %v93 = vmul.u32 %v91, 2221713035
    %v94 = vmul.u32 %v92, 2221713035
    %v95 = vshrl.u32 %v93, 16
    %v96 = vshrl.u32 %v94, 16
    %v97 = vxor.u32 %v93, %v95
    %v98 = vxor.u32 %v94, %v96
    %v99 = vshrl.u32 %v97, 9
    %v100 = vshrl.u32 %v98, 9
    %v101 = vcvt.s32.f32 %v99
    %v102 = vcvt.s32.f32 %v100
    %v103 = vadd.f32 %v101, 0.5
    %v104 = vadd.f32 %v102, 0.5
    %v105 = vmul.f32 %v103, 1.1920929e-07
    %v106 = vmul.f32 %v104, 1.1920929e-07
    %v107 = vlog2.pop %v105
    %v108 = vmul.f32 %v107, 0.6931472
    %v109 = vlog2.pop %v106
    %v110 = vmul.f32 %v109, 0.6931472
    %v111 = vsub.f32 1.0, %v105
    %v112 = vsub.f32 1.0, %v106
    %v113 = vlog2.pop %v111
    %v114 = vmul.f32 %v113, 0.6931472
    %v115 = vlog2.pop %v112
    %v116 = vmul.f32 %v115, 0.6931472
    %v117 = vsub.f32 %v108, %v114
    %v118 = vsub.f32 %v110, %v116
    %v119 = vadd.f32 %v63, %v117
    %v120 = vadd.f32 %v64, %v118
    %v121 = vmul.f32 %v119, 2.0
    %v122 = vmul.f32 %v120, 2.0
    %v123 = vand.u32 2147483647, %v121
    %v124 = vand.u32 2147483647, %v122
    %v125 = vsub.f32 0.0, %v123
    %v126 = vsub.f32 0.0, %v124
    %v127 = vmul.f32 %v125, 1.442695
    %v128 = vpow.pop %v127
    %v129 = vmul.f32 %v126, 1.442695
    %v130 = vpow.pop %v129
    %v131 = vadd.f32 %v128, 1.0
    %v132 = vadd.f32 %v130, 1.0
    %v133 = vrcp.pop %v131
    %v134 = vmul.f32 1.0, %v133
    %v135 = vrcp.pop %v132
    %v136 = vmul.f32 1.0, %v135
    %vm137 = vcmp.ge.f32.partialorder %v121, 0.0
    %vm138 = vcmp.ge.f32.partialorder %v122, 0.0
    %v139 = vmul.f32 %v128, %v134
    %v140 = vmul.f32 %v130, %v136
    %v141 = vsel %vm137, %v134, %v139
    %v142 = vsel %vm138, %v136, %v140
    %v143 = vsub.f32 %v29, %v27
    %v144 = vsub.f32 %v30, %v28
    %v145 = vmul.f32 %v143, %v141
    %v146 = vmul.f32 %v144, %v142
    %v147 = vadd.f32 %v27, %v145
    %v148 = vadd.f32 %v28, %v146
    %149 = vst [vmem:[#allocation7] sm:$0xff] %v147
    %150 = vst [vmem:[#allocation7 + $0x8] sm:$0xff] %v148
    // Predicated region
    $region10: #{tpu_custom_call.1} parent=1 // pred_check
      _
    $region11: #{tpu_custom_call.1} parent=1 // pred_check_branch
      %152 = sbr.rel (0) target = $region13
    $region12: #{tpu_custom_call.1} parent=1 // pred_region
      %s154 = ssub.s32 256, 256
      %155 = vsyncadd [#allocation6], %s154
      %s156 = sshll.u32 [#allocation7], 4
      %s157 = int_to_ptr.vmem [resolvable:$true] %s156
      %162 = dma.vmem_to_hbm [thread:$0]  %s157, 256, %s2, [#allocation6], 128, 128, 8
    $region13: #{tpu_custom_call.1} parent=1 // pred_fallthru
      _
    // Predicated region
    $region14: #{tpu_custom_call.1} parent=1 // pred_check
      _
    $region15: #{tpu_custom_call.1} parent=1 // pred_check_branch
      %164 = sbr.rel (0) target = $region17
    $region16: #{tpu_custom_call.1} parent=1 // pred_region
      %165 = dma.done [#allocation6], 256
    $region17: #{tpu_custom_call.1} parent=1 // pred_fallthru
      _
    %166 = vsyncpa [#allocation5], 1
    %167 = vsyncpa [#allocation6], 1

</llo_original>
